<compile_context>
chip_gen: v5e
topology: v5e:2x2
jax: 0.10.0
libtpu: 0.0.40
codegen_flags: <defaults>
</compile_context>

<pallas_src>
import jax
import jax.numpy as jnp
from jax import lax
from jax.experimental import pallas as pl
from jax.experimental.pallas import tpu as pltpu

LANES = 128


def _round_up(n, m):
    return -(-n // m) * m


# ----------------------------- Pallas kernel -----------------------------

def dueling_graph_dqn_forward(state_slabs, param_slab, dims):
    """Batched forward. state_slabs: [B, 2N+8, 128], param_slab: [S_param, 128]."""
    N, F, H, O, D, C = dims
    B, S_STATE, lanes = state_slabs.shape
    S_PARAM = param_slab.shape[0]
    assert lanes == LANES and param_slab.shape[1] == LANES
    assert S_STATE == 2 * N + 8
    assert max(N, H, O, 2 * D, C + 1, F) <= LANES

    # state-slab row offsets
    R_A, R_POOL, R_X = 0, N, N + 8
    # param-slab row offsets (must match pack_param_slab)
    R_W1 = 0
    R_W2 = R_W1 + F
    R_W3 = R_W2 + H
    R_WH1 = R_W3 + H
    R_WH2 = R_WH1 + O
    R_VEC = R_WH2 + 2 * D
    assert S_PARAM == _round_up(R_VEC + 11, 8)

    def kernel(state_ref, param_ref, out_ref):
        f32, bf16 = jnp.float32, jnp.bfloat16

        # normalized masked adjacency, reused by all three GCN layers
        A = state_ref[R_A:R_A + N, 0:N].astype(bf16)                     # [N, N]

        def layer_norm(h, g_row, be_row, width):
            gamma = param_ref[g_row:g_row + 1, 0:width]
            beta = param_ref[be_row:be_row + 1, 0:width]
            inv_n = 1.0 / width
            mu = jnp.sum(h, axis=-1, keepdims=True) * inv_n
            ms = jnp.sum(h * h, axis=-1, keepdims=True) * inv_n
            var = ms - mu * mu
            return (h - mu) * lax.rsqrt(var + 1e-5) * gamma + beta

        def relu_ln(h, b_row, g_row, be_row, width):
            h = h + param_ref[b_row:b_row + 1, 0:width]
            h = jnp.maximum(h, 0.0)
            # TODO(synk): F.dropout(p=0.1) skipped — module evaluated in eval mode.
            return layer_norm(h, g_row, be_row, width)

        # --- GCN layer 1, reassociated: (A @ X) @ W1 (F < H) ---
        x = state_ref[R_X:R_X + N, 0:F].astype(bf16)                     # [N, F]
        ax = jnp.dot(A, x, preferred_element_type=f32)                   # [N, F]
        w1 = param_ref[R_W1:R_W1 + F, 0:H].astype(bf16)
        h = jnp.dot(ax.astype(bf16), w1, preferred_element_type=f32)     # [N, H]
        h = relu_ln(h, R_VEC + 0, R_VEC + 1, R_VEC + 2, H)

        # --- GCN layer 2: A @ (h @ W2) ---
        w2 = param_ref[R_W2:R_W2 + H, 0:H].astype(bf16)
        hw = jnp.dot(h.astype(bf16), w2, preferred_element_type=f32)
        h = jnp.dot(A, hw.astype(bf16), preferred_element_type=f32)
        h = relu_ln(h, R_VEC + 3, R_VEC + 4, R_VEC + 5, H)

        # --- GCN layer 3: A @ (h @ W3) ---
        w3 = param_ref[R_W3:R_W3 + H, 0:O].astype(bf16)
        hw = jnp.dot(h.astype(bf16), w3, preferred_element_type=f32)
        h = jnp.dot(A, hw.astype(bf16), preferred_element_type=f32)
        h = relu_ln(h, R_VEC + 6, R_VEC + 7, R_VEC + 8, O)

        # --- global_mean_pool over the k-hop subgraph as one MXU matmul ---
        pool = state_ref[R_POOL:R_POOL + 1, 0:N].astype(bf16)            # [1, N]
        pooled = jnp.dot(pool, h.astype(bf16), preferred_element_type=f32)  # [1, O]

        # --- fused dueling heads: [adv | value] streams side by side ---
        wh1 = param_ref[R_WH1:R_WH1 + O, 0:2 * D].astype(bf16)
        hidden = jnp.dot(pooled.astype(bf16), wh1, preferred_element_type=f32)
        hidden = jnp.maximum(
            hidden + param_ref[R_VEC + 9:R_VEC + 10, 0:2 * D], 0.0)      # [1, 2D]

        # second layer packed lane-dense: cols 0:C = wa2 block, col C = wv2 block,
        # cols C+1.. are zero padding.  Result z is already a full [1,128] row.
        wh2 = param_ref[R_WH2:R_WH2 + 2 * D, :].astype(bf16)             # [2D, 128]
        z = (jnp.dot(hidden.astype(bf16), wh2, preferred_element_type=f32)
             + param_ref[R_VEC + 10:R_VEC + 11, :])                      # [1, 128]

        adv = z[:, 0:C]
        value = z[:, C:C + 1]
        corr = value - jnp.sum(adv, axis=-1, keepdims=True) * (1.0 / C)  # [1, 1]
        # lane-dense full-width store; logits live in cols 0:C (sliced outside).
        out_ref[...] = z + corr

    out = pl.pallas_call(
        kernel,
        grid=(B,),
        in_specs=[
            pl.BlockSpec((None, S_STATE, LANES), lambda b: (b, 0, 0)),
            pl.BlockSpec((S_PARAM, LANES), lambda b: (0, 0)),
        ],
        out_specs=pl.BlockSpec((None, 1, LANES), lambda b: (b, 0, 0)),
        out_shape=jax.ShapeDtypeStruct((B, 1, LANES), jnp.float32),
        compiler_params=pltpu.CompilerParams(dimension_semantics=("parallel",)),
    )(state_slabs, param_slab)
    return out[:, 0, 0:C]                                                # [B, C]


# ----------------------------- plain-JAX glue -----------------------------

def _pad128(a):
    return jnp.pad(a, ((0, 0), (0, LANES - a.shape[1])))


def build_graph_inputs(edge_index, current_node, num_nodes, k_hops):
    """Dense k-hop subgraph + GCN symmetric normalization + mean-pool row."""
    src, dst = edge_index[0], edge_index[1]
    A = jnp.zeros((num_nodes, num_nodes), jnp.float32).at[dst, src].add(1.0)
    A = jnp.minimum(A, 1.0)  # dedupe parallel edges

    # k_hop_subgraph with flow='source_to_target': frontier expands to sources
    # of edges whose target is already in the subset.
    m = jnp.zeros((num_nodes,), jnp.float32).at[current_node].set(1.0)
    for _ in range(k_hops):
        m = jnp.maximum(m, (A.T @ m > 0).astype(jnp.float32))

    # keep only edges with both endpoints in the subset, add self loops on subset
    A_sub = A * m[:, None] * m[None, :]
    A_sub = A_sub + jnp.diag(m)
    deg = jnp.sum(A_sub, axis=1)
    dinv = jnp.where(deg > 0, lax.rsqrt(deg), 0.0)
    a_hat = dinv[:, None] * A_sub * dinv[None, :]

    pool_row = (m / jnp.sum(m))[None, :]          # [1, N] mean-pool weights
    return a_hat, pool_row


def build_state_slab(a_hat, pool_row, x):
    """Pack one state's graph + features into a lane-dense [2N+8, 128] slab."""
    return jnp.concatenate(
        [_pad128(a_hat),
         jnp.pad(_pad128(pool_row), ((0, 7), (0, 0))),
         _pad128(x)], axis=0)


def pack_param_slab(p, F, H, O, D, C):
    """Pack all parameters into one lane-dense [S_param, 128] slab."""
    wh1 = jnp.concatenate([p["wa1"], p["wv1"]], axis=1)         # [O, 2D]
    wh2 = jnp.zeros((2 * D, C + 1), jnp.float32)
    wh2 = wh2.at[0:D, 0:C].set(p["wa2"])                        # adv block
    wh2 = wh2.at[D:2 * D, C:C + 1].set(p["wv2"])                # value block
    bh1 = jnp.concatenate([p["ba1"], p["bv1"]], axis=1)         # [1, 2D]
    bh2 = jnp.concatenate([p["ba2"], p["bv2"]], axis=1)         # [1, C+1]

    rows = [p["w1"], p["w2"], p["w3"], wh1, wh2,
            p["b1"], p["g1"], p["be1"],
            p["b2"], p["g2"], p["be2"],
            p["b3"], p["g3"], p["be3"],
            bh1, bh2]
    slab = jnp.concatenate([_pad128(r) for r in rows], axis=0)
    s_param = _round_up(slab.shape[0], 8)
    return jnp.pad(slab, ((0, s_param - slab.shape[0]), (0, 0)))


def init_params(key, F, H, O, D, C):
    ks = jax.random.split(key, 20)

    def lin_w(k, fan_in, fan_out):
        return (jax.random.normal(k, (fan_in, fan_out), jnp.float32)
                / jnp.sqrt(jnp.float32(fan_in)))

    def lin_b(k, fan_out):
        return jax.random.normal(k, (1, fan_out), jnp.float32) * 0.01

    p = {}
    p["w1"], p["b1"] = lin_w(ks[0], F, H), lin_b(ks[1], H)
    p["w2"], p["b2"] = lin_w(ks[2], H, H), lin_b(ks[3], H)
    p["w3"], p["b3"] = lin_w(ks[4], H, O), lin_b(ks[5], O)
    p["g1"] = 1.0 + 0.1 * jax.random.normal(ks[6], (1, H), jnp.float32)
    p["be1"] = 0.1 * jax.random.normal(ks[7], (1, H), jnp.float32)
    p["g2"] = 1.0 + 0.1 * jax.random.normal(ks[8], (1, H), jnp.float32)
    p["be2"] = 0.1 * jax.random.normal(ks[9], (1, H), jnp.float32)
    p["g3"] = 1.0 + 0.1 * jax.random.normal(ks[10], (1, O), jnp.float32)
    p["be3"] = 0.1 * jax.random.normal(ks[11], (1, O), jnp.float32)
    p["wv1"], p["bv1"] = lin_w(ks[12], O, D), lin_b(ks[13], D)
    p["wv2"], p["bv2"] = lin_w(ks[14], D, 1), lin_b(ks[15], 1)
    p["wa1"], p["ba1"] = lin_w(ks[16], O, D), lin_b(ks[17], D)
    p["wa2"], p["ba2"] = lin_w(ks[18], D, C), lin_b(ks[19], C)
    return p


def reference_forward(a_hat, pool_row, x, p):
    """Pure-JAX f32 reference mirroring the PyTorch module (eval mode)."""
    h = x
    for w, b, g, be in ((p["w1"], p["b1"], p["g1"], p["be1"]),
                        (p["w2"], p["b2"], p["g2"], p["be2"]),
                        (p["w3"], p["b3"], p["g3"], p["be3"])):
        h = a_hat @ (h @ w) + b
        h = jnp.maximum(h, 0.0)
        mu = h.mean(-1, keepdims=True)
        var = ((h - mu) ** 2).mean(-1, keepdims=True)
        h = (h - mu) / jnp.sqrt(var + 1e-5) * g + be
    pooled = pool_row @ h
    hv = jnp.maximum(pooled @ p["wv1"] + p["bv1"], 0.0)
    v = hv @ p["wv2"] + p["bv2"]
    ha = jnp.maximum(pooled @ p["wa1"] + p["ba1"], 0.0)
    a = ha @ p["wa2"] + p["ba2"]
    return v + (a - a.mean(-1, keepdims=True))


# ----------------------------- main -----------------------------

if __name__ == "__main__":
    key = jax.random.PRNGKey(0)

    N = 32   # num graph nodes
    F = 8    # node_feature_dim
    H = 32   # gnn_hidden_dim
    O = 32   # gnn_output_dim
    D = 32   # dqn_hidden_dim
    C = 8    # num_classes
    K = 4    # k_hops
    B = 4    # batch of independent states per kernel launch

    kx, kp = jax.random.split(key)
    xs = jax.random.normal(kx, (B, N, F), jnp.float32)

    # undirected ring + a few chords, stored as directed edges both ways
    ring_s = jnp.arange(N, dtype=jnp.int32)
    ring_d = (ring_s + 1) % N
    chord_s = jnp.array([0, 5, 10, 3], dtype=jnp.int32)
    chord_d = jnp.array([16, 20, 27, 14], dtype=jnp.int32)
    src = jnp.concatenate([ring_s, ring_d, chord_s, chord_d])
    dst = jnp.concatenate([ring_d, ring_s, chord_d, chord_s])
    edge_index = jnp.stack([src, dst])                       # [2, 72]
    current_nodes = jnp.array([7, 0, 21, 13], dtype=jnp.int32)

    params = init_params(kp, F, H, O, D, C)
    param_slab = pack_param_slab(params, F, H, O, D, C)

    state_slabs, refs = [], []
    for b in range(B):
        a_hat, pool_row = build_graph_inputs(edge_index, current_nodes[b], N, K)
        state_slabs.append(build_state_slab(a_hat, pool_row, xs[b]))
        refs.append(reference_forward(a_hat, pool_row, xs[b], params))
    state_slabs = jnp.stack(state_slabs)                      # [B, 2N+8, 128]
    ref = jnp.concatenate(refs, axis=0)                       # [B, C]

    logits = dueling_graph_dqn_forward(state_slabs, param_slab, (N, F, H, O, D, C))
    logits = jax.block_until_ready(logits)

    assert logits.shape == (B, C)
    err = jnp.max(jnp.abs(logits - ref))
    assert err < 5e-2, f"mismatch vs pure-JAX reference: {err}"

    print("KERNEL_OK")
</pallas_src>

<mosaic_0001>
module attributes {stable_mosaic.version = 11 : i64} {
  func.func @kernel(%arg0: i32, %arg1: memref<1x72x128xf32, #tpu.memory_space<vmem>>, %arg2: memref<184x128xf32, #tpu.memory_space<vmem>>, %arg3: memref<1x1x128xf32, #tpu.memory_space<vmem>>) attributes {dimension_semantics = [#tpu.dimension_semantics<parallel>], iteration_bounds = array<i64: 4>, scalar_prefetch = 0 : i64, scratch_operands = 0 : i64, tpu.core_type = #tpu.core_type<tc>, window_params = [{transform_indices = @transform_0, window_bounds = array<i64: 1, 72, 128>}, {pipeline_mode = #tpu.pipeline_mode<synchronous>, transform_indices = @transform_1, window_bounds = array<i64: 184, 128>}, {transform_indices = @transform_2, window_bounds = array<i64: 1, 1, 128>}]} {
    %c0 = arith.constant 0 : index
    %c0_0 = arith.constant 0 : index
    %c0_1 = arith.constant 0 : index
    %0 = vector.load %arg1[%c0, %c0_0, %c0_1] : memref<1x72x128xf32, #tpu.memory_space<vmem>>, vector<1x32x32xf32>
    %1 = vector.shape_cast %0 : vector<1x32x32xf32> to vector<32x32xf32>
    %2 = arith.truncf %1 : vector<32x32xf32> to vector<32x32xbf16>
    %c0_2 = arith.constant 0 : index
    %c40 = arith.constant 40 : index
    %c0_3 = arith.constant 0 : index
    %3 = vector.load %arg1[%c0_2, %c40, %c0_3] : memref<1x72x128xf32, #tpu.memory_space<vmem>>, vector<1x32x8xf32>
    %4 = vector.shape_cast %3 : vector<1x32x8xf32> to vector<32x8xf32>
    %5 = arith.truncf %4 : vector<32x8xf32> to vector<32x8xbf16>
    %cst = arith.constant dense<0.000000e+00> : vector<32x8xf32>
    %6 = tpu.matmul %2, %5, %cst {dimension_numbers = #tpu.dot_dimension_numbers<[1], [0], [0], [1], [0, 0, 1, 1], [], []>} : vector<32x32xbf16>, vector<32x8xbf16>, vector<32x8xf32> -> vector<32x8xf32>
    %c0_4 = arith.constant 0 : index
    %c0_5 = arith.constant 0 : index
    %7 = vector.load %arg2[%c0_4, %c0_5] : memref<184x128xf32, #tpu.memory_space<vmem>>, vector<8x32xf32>
    %8 = arith.truncf %7 : vector<8x32xf32> to vector<8x32xbf16>
    %9 = arith.truncf %6 : vector<32x8xf32> to vector<32x8xbf16>
    %cst_6 = arith.constant dense<0.000000e+00> : vector<32x32xf32>
    %10 = tpu.matmul %9, %8, %cst_6 {dimension_numbers = #tpu.dot_dimension_numbers<[1], [0], [0], [1], [0, 0, 1, 1], [], []>} : vector<32x8xbf16>, vector<8x32xbf16>, vector<32x32xf32> -> vector<32x32xf32>
    %c168 = arith.constant 168 : index
    %c0_7 = arith.constant 0 : index
    %11 = vector.load %arg2[%c168, %c0_7] : memref<184x128xf32, #tpu.memory_space<vmem>>, vector<1x32xf32>
    %12 = vector.broadcast %11 : vector<1x32xf32> to vector<32x32xf32>
    %13 = arith.addf %10, %12 : vector<32x32xf32>
    %cst_8 = arith.constant 0.000000e+00 : f32
    %14 = vector.broadcast %cst_8 : f32 to vector<32x32xf32>
    %15 = arith.maximumf %13, %14 : vector<32x32xf32>
    %c169 = arith.constant 169 : index
    %c0_9 = arith.constant 0 : index
    %16 = vector.load %arg2[%c169, %c0_9] : memref<184x128xf32, #tpu.memory_space<vmem>>, vector<1x32xf32>
    %c170 = arith.constant 170 : index
    %c0_10 = arith.constant 0 : index
    %17 = vector.load %arg2[%c170, %c0_10] : memref<184x128xf32, #tpu.memory_space<vmem>>, vector<1x32xf32>
    %cst_11 = arith.constant dense<0.000000e+00> : vector<32xf32>
    %18 = vector.multi_reduction <add>, %15, %cst_11 [1] : vector<32x32xf32> to vector<32xf32>
    %19 = vector.shape_cast %18 : vector<32xf32> to vector<32x1xf32>
    %cst_12 = arith.constant 3.125000e-02 : f32
    %20 = vector.broadcast %cst_12 : f32 to vector<32x1xf32>
    %21 = arith.mulf %19, %20 : vector<32x1xf32>
    %22 = arith.mulf %15, %15 : vector<32x32xf32>
    %cst_13 = arith.constant dense<0.000000e+00> : vector<32xf32>
    %23 = vector.multi_reduction <add>, %22, %cst_13 [1] : vector<32x32xf32> to vector<32xf32>
    %24 = vector.shape_cast %23 : vector<32xf32> to vector<32x1xf32>
    %cst_14 = arith.constant 3.125000e-02 : f32
    %25 = vector.broadcast %cst_14 : f32 to vector<32x1xf32>
    %26 = arith.mulf %24, %25 : vector<32x1xf32>
    %27 = arith.mulf %21, %21 : vector<32x1xf32>
    %28 = arith.subf %26, %27 : vector<32x1xf32>
    %29 = vector.broadcast %21 : vector<32x1xf32> to vector<32x32xf32>
    %30 = arith.subf %15, %29 : vector<32x32xf32>
    %cst_15 = arith.constant 9.99999974E-6 : f32
    %31 = vector.broadcast %cst_15 : f32 to vector<32x1xf32>
    %32 = arith.addf %28, %31 : vector<32x1xf32>
    %33 = math.rsqrt %32 : vector<32x1xf32>
    %34 = vector.broadcast %33 : vector<32x1xf32> to vector<32x32xf32>
    %35 = arith.mulf %30, %34 : vector<32x32xf32>
    %36 = vector.broadcast %16 : vector<1x32xf32> to vector<32x32xf32>
    %37 = arith.mulf %35, %36 : vector<32x32xf32>
    %38 = vector.broadcast %17 : vector<1x32xf32> to vector<32x32xf32>
    %39 = arith.addf %37, %38 : vector<32x32xf32>
    %c8 = arith.constant 8 : index
    %c0_16 = arith.constant 0 : index
    %40 = vector.load %arg2[%c8, %c0_16] : memref<184x128xf32, #tpu.memory_space<vmem>>, vector<32x32xf32>
    %41 = arith.truncf %40 : vector<32x32xf32> to vector<32x32xbf16>
    %42 = arith.truncf %39 : vector<32x32xf32> to vector<32x32xbf16>
    %cst_17 = arith.constant dense<0.000000e+00> : vector<32x32xf32>
    %43 = tpu.matmul %42, %41, %cst_17 {dimension_numbers = #tpu.dot_dimension_numbers<[1], [0], [0], [1], [0, 0, 1, 1], [], []>} : vector<32x32xbf16>, vector<32x32xbf16>, vector<32x32xf32> -> vector<32x32xf32>
    %44 = arith.truncf %43 : vector<32x32xf32> to vector<32x32xbf16>
    %cst_18 = arith.constant dense<0.000000e+00> : vector<32x32xf32>
    %45 = tpu.matmul %2, %44, %cst_18 {dimension_numbers = #tpu.dot_dimension_numbers<[1], [0], [0], [1], [0, 0, 1, 1], [], []>} : vector<32x32xbf16>, vector<32x32xbf16>, vector<32x32xf32> -> vector<32x32xf32>
    %c171 = arith.constant 171 : index
    %c0_19 = arith.constant 0 : index
    %46 = vector.load %arg2[%c171, %c0_19] : memref<184x128xf32, #tpu.memory_space<vmem>>, vector<1x32xf32>
    %47 = vector.broadcast %46 : vector<1x32xf32> to vector<32x32xf32>
    %48 = arith.addf %45, %47 : vector<32x32xf32>
    %cst_20 = arith.constant 0.000000e+00 : f32
    %49 = vector.broadcast %cst_20 : f32 to vector<32x32xf32>
    %50 = arith.maximumf %48, %49 : vector<32x32xf32>
    %c172 = arith.constant 172 : index
    %c0_21 = arith.constant 0 : index
    %51 = vector.load %arg2[%c172, %c0_21] : memref<184x128xf32, #tpu.memory_space<vmem>>, vector<1x32xf32>
    %c173 = arith.constant 173 : index
    %c0_22 = arith.constant 0 : index
    %52 = vector.load %arg2[%c173, %c0_22] : memref<184x128xf32, #tpu.memory_space<vmem>>, vector<1x32xf32>
    %cst_23 = arith.constant dense<0.000000e+00> : vector<32xf32>
    %53 = vector.multi_reduction <add>, %50, %cst_23 [1] : vector<32x32xf32> to vector<32xf32>
    %54 = vector.shape_cast %53 : vector<32xf32> to vector<32x1xf32>
    %cst_24 = arith.constant 3.125000e-02 : f32
    %55 = vector.broadcast %cst_24 : f32 to vector<32x1xf32>
    %56 = arith.mulf %54, %55 : vector<32x1xf32>
    %57 = arith.mulf %50, %50 : vector<32x32xf32>
    %cst_25 = arith.constant dense<0.000000e+00> : vector<32xf32>
    %58 = vector.multi_reduction <add>, %57, %cst_25 [1] : vector<32x32xf32> to vector<32xf32>
    %59 = vector.shape_cast %58 : vector<32xf32> to vector<32x1xf32>
    %cst_26 = arith.constant 3.125000e-02 : f32
    %60 = vector.broadcast %cst_26 : f32 to vector<32x1xf32>
    %61 = arith.mulf %59, %60 : vector<32x1xf32>
    %62 = arith.mulf %56, %56 : vector<32x1xf32>
    %63 = arith.subf %61, %62 : vector<32x1xf32>
    %64 = vector.broadcast %56 : vector<32x1xf32> to vector<32x32xf32>
    %65 = arith.subf %50, %64 : vector<32x32xf32>
    %cst_27 = arith.constant 9.99999974E-6 : f32
    %66 = vector.broadcast %cst_27 : f32 to vector<32x1xf32>
    %67 = arith.addf %63, %66 : vector<32x1xf32>
    %68 = math.rsqrt %67 : vector<32x1xf32>
    %69 = vector.broadcast %68 : vector<32x1xf32> to vector<32x32xf32>
    %70 = arith.mulf %65, %69 : vector<32x32xf32>
    %71 = vector.broadcast %51 : vector<1x32xf32> to vector<32x32xf32>
    %72 = arith.mulf %70, %71 : vector<32x32xf32>
    %73 = vector.broadcast %52 : vector<1x32xf32> to vector<32x32xf32>
    %74 = arith.addf %72, %73 : vector<32x32xf32>
    %c40_28 = arith.constant 40 : index
    %c0_29 = arith.constant 0 : index
    %75 = vector.load %arg2[%c40_28, %c0_29] : memref<184x128xf32, #tpu.memory_space<vmem>>, vector<32x32xf32>
    %76 = arith.truncf %75 : vector<32x32xf32> to vector<32x32xbf16>
    %77 = arith.truncf %74 : vector<32x32xf32> to vector<32x32xbf16>
    %cst_30 = arith.constant dense<0.000000e+00> : vector<32x32xf32>
    %78 = tpu.matmul %77, %76, %cst_30 {dimension_numbers = #tpu.dot_dimension_numbers<[1], [0], [0], [1], [0, 0, 1, 1], [], []>} : vector<32x32xbf16>, vector<32x32xbf16>, vector<32x32xf32> -> vector<32x32xf32>
    %79 = arith.truncf %78 : vector<32x32xf32> to vector<32x32xbf16>
    %cst_31 = arith.constant dense<0.000000e+00> : vector<32x32xf32>
    %80 = tpu.matmul %2, %79, %cst_31 {dimension_numbers = #tpu.dot_dimension_numbers<[1], [0], [0], [1], [0, 0, 1, 1], [], []>} : vector<32x32xbf16>, vector<32x32xbf16>, vector<32x32xf32> -> vector<32x32xf32>
    %c174 = arith.constant 174 : index
    %c0_32 = arith.constant 0 : index
    %81 = vector.load %arg2[%c174, %c0_32] : memref<184x128xf32, #tpu.memory_space<vmem>>, vector<1x32xf32>
    %82 = vector.broadcast %81 : vector<1x32xf32> to vector<32x32xf32>
    %83 = arith.addf %80, %82 : vector<32x32xf32>
    %cst_33 = arith.constant 0.000000e+00 : f32
    %84 = vector.broadcast %cst_33 : f32 to vector<32x32xf32>
    %85 = arith.maximumf %83, %84 : vector<32x32xf32>
    %c175 = arith.constant 175 : index
    %c0_34 = arith.constant 0 : index
    %86 = vector.load %arg2[%c175, %c0_34] : memref<184x128xf32, #tpu.memory_space<vmem>>, vector<1x32xf32>
    %c176 = arith.constant 176 : index
    %c0_35 = arith.constant 0 : index
    %87 = vector.load %arg2[%c176, %c0_35] : memref<184x128xf32, #tpu.memory_space<vmem>>, vector<1x32xf32>
    %cst_36 = arith.constant dense<0.000000e+00> : vector<32xf32>
    %88 = vector.multi_reduction <add>, %85, %cst_36 [1] : vector<32x32xf32> to vector<32xf32>
    %89 = vector.shape_cast %88 : vector<32xf32> to vector<32x1xf32>
    %cst_37 = arith.constant 3.125000e-02 : f32
    %90 = vector.broadcast %cst_37 : f32 to vector<32x1xf32>
    %91 = arith.mulf %89, %90 : vector<32x1xf32>
    %92 = arith.mulf %85, %85 : vector<32x32xf32>
    %cst_38 = arith.constant dense<0.000000e+00> : vector<32xf32>
    %93 = vector.multi_reduction <add>, %92, %cst_38 [1] : vector<32x32xf32> to vector<32xf32>
    %94 = vector.shape_cast %93 : vector<32xf32> to vector<32x1xf32>
    %cst_39 = arith.constant 3.125000e-02 : f32
    %95 = vector.broadcast %cst_39 : f32 to vector<32x1xf32>
    %96 = arith.mulf %94, %95 : vector<32x1xf32>
    %97 = arith.mulf %91, %91 : vector<32x1xf32>
    %98 = arith.subf %96, %97 : vector<32x1xf32>
    %99 = vector.broadcast %91 : vector<32x1xf32> to vector<32x32xf32>
    %100 = arith.subf %85, %99 : vector<32x32xf32>
    %cst_40 = arith.constant 9.99999974E-6 : f32
    %101 = vector.broadcast %cst_40 : f32 to vector<32x1xf32>
    %102 = arith.addf %98, %101 : vector<32x1xf32>
    %103 = math.rsqrt %102 : vector<32x1xf32>
    %104 = vector.broadcast %103 : vector<32x1xf32> to vector<32x32xf32>
    %105 = arith.mulf %100, %104 : vector<32x32xf32>
    %106 = vector.broadcast %86 : vector<1x32xf32> to vector<32x32xf32>
    %107 = arith.mulf %105, %106 : vector<32x32xf32>
    %108 = vector.broadcast %87 : vector<1x32xf32> to vector<32x32xf32>
    %109 = arith.addf %107, %108 : vector<32x32xf32>
    %c0_41 = arith.constant 0 : index
    %c32 = arith.constant 32 : index
    %c0_42 = arith.constant 0 : index
    %110 = vector.load %arg1[%c0_41, %c32, %c0_42] : memref<1x72x128xf32, #tpu.memory_space<vmem>>, vector<1x1x32xf32>
    %111 = vector.shape_cast %110 : vector<1x1x32xf32> to vector<1x32xf32>
    %112 = arith.truncf %111 : vector<1x32xf32> to vector<1x32xbf16>
    %113 = arith.truncf %109 : vector<32x32xf32> to vector<32x32xbf16>
    %cst_43 = arith.constant dense<0.000000e+00> : vector<1x32xf32>
    %114 = tpu.matmul %112, %113, %cst_43 {dimension_numbers = #tpu.dot_dimension_numbers<[1], [0], [0], [1], [0, 0, 1, 1], [], []>} : vector<1x32xbf16>, vector<32x32xbf16>, vector<1x32xf32> -> vector<1x32xf32>
    %c72 = arith.constant 72 : index
    %c0_44 = arith.constant 0 : index
    %115 = vector.load %arg2[%c72, %c0_44] : memref<184x128xf32, #tpu.memory_space<vmem>>, vector<32x64xf32>
    %116 = arith.truncf %115 : vector<32x64xf32> to vector<32x64xbf16>
    %117 = arith.truncf %114 : vector<1x32xf32> to vector<1x32xbf16>
    %cst_45 = arith.constant dense<0.000000e+00> : vector<1x64xf32>
    %118 = tpu.matmul %117, %116, %cst_45 {dimension_numbers = #tpu.dot_dimension_numbers<[1], [0], [0], [1], [0, 0, 1, 1], [], []>} : vector<1x32xbf16>, vector<32x64xbf16>, vector<1x64xf32> -> vector<1x64xf32>
    %c177 = arith.constant 177 : index
    %c0_46 = arith.constant 0 : index
    %119 = vector.load %arg2[%c177, %c0_46] : memref<184x128xf32, #tpu.memory_space<vmem>>, vector<1x64xf32>
    %120 = arith.addf %118, %119 : vector<1x64xf32>
    %cst_47 = arith.constant 0.000000e+00 : f32
    %121 = vector.broadcast %cst_47 : f32 to vector<1x64xf32>
    %122 = arith.maximumf %120, %121 : vector<1x64xf32>
    %c104 = arith.constant 104 : index
    %c0_48 = arith.constant 0 : index
    %123 = vector.load %arg2[%c104, %c0_48] : memref<184x128xf32, #tpu.memory_space<vmem>>, vector<64x128xf32>
    %124 = arith.truncf %123 : vector<64x128xf32> to vector<64x128xbf16>
    %125 = arith.truncf %122 : vector<1x64xf32> to vector<1x64xbf16>
    %cst_49 = arith.constant dense<0.000000e+00> : vector<1x128xf32>
    %126 = tpu.matmul %125, %124, %cst_49 {dimension_numbers = #tpu.dot_dimension_numbers<[1], [0], [0], [1], [0, 0, 1, 1], [], []>} : vector<1x64xbf16>, vector<64x128xbf16>, vector<1x128xf32> -> vector<1x128xf32>
    %c178 = arith.constant 178 : index
    %c0_50 = arith.constant 0 : index
    %127 = vector.load %arg2[%c178, %c0_50] : memref<184x128xf32, #tpu.memory_space<vmem>>, vector<1x128xf32>
    %128 = arith.addf %126, %127 : vector<1x128xf32>
    %129 = vector.extract_strided_slice %128 {offsets = [0, 0], sizes = [1, 8], strides = [1, 1]} : vector<1x128xf32> to vector<1x8xf32>
    %130 = vector.extract_strided_slice %128 {offsets = [0, 8], sizes = [1, 1], strides = [1, 1]} : vector<1x128xf32> to vector<1x1xf32>
    %cst_51 = arith.constant dense<0.000000e+00> : vector<1xf32>
    %131 = vector.multi_reduction <add>, %129, %cst_51 [1] : vector<1x8xf32> to vector<1xf32>
    %132 = vector.shape_cast %131 : vector<1xf32> to vector<1x1xf32>
    %cst_52 = arith.constant 1.250000e-01 : f32
    %133 = vector.broadcast %cst_52 : f32 to vector<1x1xf32>
    %134 = arith.mulf %132, %133 : vector<1x1xf32>
    %135 = arith.subf %130, %134 : vector<1x1xf32>
    %136 = vector.broadcast %135 : vector<1x1xf32> to vector<1x128xf32>
    %137 = arith.addf %128, %136 : vector<1x128xf32>
    %c0_53 = arith.constant 0 : index
    %c0_54 = arith.constant 0 : index
    %c0_55 = arith.constant 0 : index
    %138 = vector.load %arg3[%c0_53, %c0_54, %c0_55] : memref<1x1x128xf32, #tpu.memory_space<vmem>>, vector<1x1x128xf32>
    %139 = vector.shape_cast %138 : vector<1x1x128xf32> to vector<1x128xf32>
    %140 = vector.shape_cast %137 : vector<1x128xf32> to vector<1x1x128xf32>
    tpu.vector_store %arg3[%c0_53, %c0_54, %c0_55], %140 {strides = array<i32>} : memref<1x1x128xf32, #tpu.memory_space<vmem>>, vector<1x1x128xf32>,
    return
  }
  func.func @transform_0(%arg0: i32) -> (i32, i32, i32) {
    %c0_i32 = arith.constant 0 : i32
    %c0_i32_0 = arith.constant 0 : i32
    %c0_i32_1 = arith.constant 0 : i32
    return %arg0, %c0_i32, %c0_i32_0 : i32, i32, i32
  }
  func.func @transform_1(%arg0: i32) -> (i32, i32) {
    %c0_i32 = arith.constant 0 : i32
    %c0_i32_0 = arith.constant 0 : i32
    %c0_i32_1 = arith.constant 0 : i32
    return %c0_i32, %c0_i32_0 : i32, i32
  }
  func.func @transform_2(%arg0: i32) -> (i32, i32, i32) {
    %c0_i32 = arith.constant 0 : i32
    %c0_i32_0 = arith.constant 0 : i32
    %c0_i32_1 = arith.constant 0 : i32
    return %arg0, %c0_i32, %c0_i32_0 : i32, i32, i32
  }
}

</mosaic_0001>

<llo_original>
// kernel: tpu_custom_call.1
$region0: #{tpu_custom_call.1}
  #allocation0 [shape = 'u32[]', space=smem, size = 0x4, offset = 0x4, fixed_abs, tag = 'smem constant byte address 0x4 - core index']
  #allocation1 [shape = 'u32[72,128]{1,0:T(1,128)}', space=vmem, size = 0x9000, scoped, tag = 'internal scratch']
  %s0 = inlined_call_operand.hbm [shape: f32[4,72,128], index: 0, kind: input, shape index: {}]
  %s1 = inlined_call_operand.hbm [shape: f32[184,128], index: 1, kind: input, shape index: {}]
  %s2 = inlined_call_operand.hbm [shape: f32[4,1,128], index: 2, kind: output, shape index: {}]
  %s3 = sld [smem:[#allocation0]]
  $region49: #{tpu_custom_call.1} parent=0
    _
  %s5 = ssub.s32 1, %s3
  %s6 = scalar_select 0, %s5, %s3
  $region1: #{tpu_custom_call.1} parent=0
    #allocation2 [shape = 'u8[73728]{0}', space=vmem, size = 0x12000, scoped, tag = 'input window, operand 0']
    #allocation3 [shape = 's32[2]{0}', space=sflag, size = 0x8, scoped, tag = 'scoped memory for tpu_custom_call.1']
    #allocation4 [shape = 's32[2]{0}', space=sflag, size = 0x8, scoped, tag = 'scoped memory for tpu_custom_call.1']
    #allocation5 [shape = 'u8[94208]{0}', space=vmem, size = 0x17000, scoped, tag = 'input window, operand 1, single buffered']
    #allocation6 [shape = 's32[1]{0}', space=sflag, size = 0x4, scoped, tag = 'scoped memory for tpu_custom_call.1']
    #allocation7 [shape = 'u8[1024]{0}', space=vmem, size = 0x400, scoped, tag = 'output window, operand 0']
    %7 = vsyncpa [#allocation3], 0
    %s8 = scalar_lea.sflag [#allocation3], 1
    %9 = vsyncpa %s8, 0
    %10 = vsyncpa [#allocation6], 0
    %11 = vsyncpa [#allocation4], 0
    %s12 = scalar_lea.sflag [#allocation4], 1
    %13 = vsyncpa %s12, 0
    loop: start=0, step=1, limit=6
    $region2: #{tpu_custom_call.1} parent=1 // loop_pre_header
      _
    $region3: #{tpu_custom_call.1} parent=1 // loop_header
      %s15 = sphi 0, %s19
      %p16 = scmp.ge.s32.totalorder %s15, 6
      %s25 = sphi 0, %s27
      %s28 = sphi 0, %s25
      %s29 = sphi 0, %s28
      %s45 = sphi 0, %s29
      %s49 = sphi 0, %s49
      %s51 = sphi 0, %s49
      %s52 = sphi 0, %s51
      %s66 = sphi 0, %s52
      %s72 = sphi 0, %s74
      %s75 = sphi 0, %s72
      %s76 = sphi 0, %s75
      %s92 = sphi 0, %s76
    $region4: #{tpu_custom_call.1} parent=1 // loop_header_branch
      %18 = sbr.rel (%p16) target = $region8
    $region5: #{tpu_custom_call.1} parent=1 // loop_body
      %s20 = ssub.s32 %s15, 1
      %s21 = ssub.s32 %s15, 2
      %s22 = sadd.s32 %s15, 1
      %s23 = ssub.s32 %s15, %s22
      %p24 = scmp.eq.s32.totalorder %s23, 0
      %s26 = sadd.s32 %s25, 1
      %s27 = scalar_select %p24, %s25, %s26
      %p30 = pneg %p24
      %p31 = scmp.eq.s32.totalorder %s15, 3
      %p32 = por %p30, %p31
      %p33 = scmp.ne.s32.totalorder %s25, %s28
      %p34 = scmp.eq.s32.totalorder %s15, 0
      %p35 = por %p33, %p34
      %p36 = scmp.ne.s32.totalorder %s25, %s28
      %p37 = scmp.eq.s32.totalorder %s20, 3
      %p38 = por %p36, %p37
      %p39 = scmp.ne.s32.totalorder %s28, %s29
      %p40 = scmp.eq.s32.totalorder %s20, 0
      %p41 = por %p39, %p40
      %p42 = scmp.ne.s32.totalorder %s28, %s29
      %p43 = scmp.eq.s32.totalorder %s21, 3
      %p44 = por %p42, %p43
      %p46 = scmp.ne.s32.totalorder %s29, %s45
      %p47 = scmp.eq.s32.totalorder %s21, 0
      %p48 = por %p46, %p47
      %s50 = sadd.s32 %s49, 1
      %p53 = scmp.eq.s32.totalorder %s15, 3
      %p54 = scmp.ne.s32.totalorder %s49, %s51
      %p55 = scmp.eq.s32.totalorder %s15, 0
      %p56 = por %p54, %p55
      %p57 = scmp.ne.s32.totalorder %s49, %s51
      %p58 = scmp.eq.s32.totalorder %s20, 3
      %p59 = por %p57, %p58
      %p60 = scmp.ne.s32.totalorder %s51, %s52
      %p61 = scmp.eq.s32.totalorder %s20, 0
      %p62 = por %p60, %p61
      %p63 = scmp.ne.s32.totalorder %s51, %s52
      %p64 = scmp.eq.s32.totalorder %s21, 3
      %p65 = por %p63, %p64
      %p67 = scmp.ne.s32.totalorder %s52, %s66
      %p68 = scmp.eq.s32.totalorder %s21, 0
      %p69 = por %p67, %p68
      %s70 = ssub.s32 %s15, %s22
      %p71 = scmp.eq.s32.totalorder %s70, 0
      %s73 = sadd.s32 %s72, 1
      %s74 = scalar_select %p71, %s72, %s73
      %p77 = pneg %p71
      %p78 = scmp.eq.s32.totalorder %s15, 3
      %p79 = por %p77, %p78
      %p80 = scmp.ne.s32.totalorder %s72, %s75
      %p81 = scmp.eq.s32.totalorder %s15, 0
      %p82 = por %p80, %p81
      %p83 = scmp.ne.s32.totalorder %s72, %s75
      %p84 = scmp.eq.s32.totalorder %s20, 3
      %p85 = por %p83, %p84
      %p86 = scmp.ne.s32.totalorder %s75, %s76
      %p87 = scmp.eq.s32.totalorder %s20, 0
      %p88 = por %p86, %p87
      %p89 = scmp.ne.s32.totalorder %s75, %s76
      %p90 = scmp.eq.s32.totalorder %s21, 3
      %p91 = por %p89, %p90
      %p93 = scmp.ne.s32.totalorder %s76, %s92
      %p94 = scmp.eq.s32.totalorder %s21, 0
      %p95 = por %p93, %p94
      %p96 = scmp.le.s32.totalorder 1, %s15
      %p97 = scmp.lt.s32.totalorder %s15, 5
      %p98 = pnand %p96, %p97
      %p99 = pneg %p98
      // Predicated region
      $region9: #{tpu_custom_call.1} parent=5 // pred_check
        _
      $region10: #{tpu_custom_call.1} parent=5 // pred_check_branch
        %101 = sbr.rel (%p98) target = $region12
      $region11: #{tpu_custom_call.1} parent=5 // pred_region
        %s102 = ssub.s32 %s15, 1
        // Predicated region
        $region13: #{tpu_custom_call.1} parent=11 // pred_check
          %p103 = pneg %p62
        $region14: #{tpu_custom_call.1} parent=11 // pred_check_branch
          %105 = sbr.rel (%p103) target = $region16
        $region15: #{tpu_custom_call.1} parent=11 // pred_region
          %107 = vsyncadd [#allocation6], 0
          %s108 = sshll.u32 %s1, 4
          %s109 = int_to_ptr.hbm [resolvable:$true] %s108
          %s110 = sshll.u32 [#allocation5], 4
          %s111 = int_to_ptr.vmem [resolvable:$true] %s110
          %116 = dma.hbm_to_vmem [thread:$0]  %s109, 2944, %s111, [#allocation6], 128, 128, 8
        $region16: #{tpu_custom_call.1} parent=11 // pred_fallthru
          _
      $region12: #{tpu_custom_call.1} parent=5 // pred_fallthru
        _
      %p117 = scmp.lt.s32.totalorder %s15, 4
      // Predicated region
      $region17: #{tpu_custom_call.1} parent=5 // pred_check
        %p118 = pneg %p117
      $region18: #{tpu_custom_call.1} parent=5 // pred_check_branch
        %120 = sbr.rel (%p118) target = $region20
      $region19: #{tpu_custom_call.1} parent=5 // pred_region
        // Predicated region
        $region21: #{tpu_custom_call.1} parent=19 // pred_check
          %p121 = pneg %p35
        $region22: #{tpu_custom_call.1} parent=19 // pred_check_branch
          %123 = sbr.rel (%p121) target = $region24
        $region23: #{tpu_custom_call.1} parent=19 // pred_region
          %s124 = sand.u32 %s25, 1
          %s125 = scalar_lea.sflag [#allocation3], %s124
          %s126 = sand.u32 %s25, 1
          %s127 = smul.addr %s126, 72
          %s128 = scalar_lea.vmem [#allocation2], %s127
          %130 = vsyncadd %s125, 0
          %s131 = smul.addr %s15, 9
          %s132 = smul.addr %s131, 8
          %s133 = scalar_lea.hbm %s0, %s132
          %s134 = sshll.u32 %s133, 4
          %s135 = int_to_ptr.hbm [resolvable:$true] %s134
          %s136 = sshll.u32 %s128, 4
          %s137 = int_to_ptr.vmem [resolvable:$true] %s136
          %142 = dma.hbm_to_vmem [thread:$0]  %s135, 1152, %s137, %s125, 128, 128, 8
        $region24: #{tpu_custom_call.1} parent=19 // pred_fallthru
          _
      $region20: #{tpu_custom_call.1} parent=5 // pred_fallthru
        _
      %p143 = scmp.le.s32.totalorder 1, %s15
      %p144 = scmp.lt.s32.totalorder %s15, 5
      %p145 = pnand %p143, %p144
      %p146 = pneg %p145
      // Predicated region
      $region25: #{tpu_custom_call.1} parent=5 // pred_check
        _
      $region26: #{tpu_custom_call.1} parent=5 // pred_check_branch
        %148 = sbr.rel (%p145) target = $region28
      $region27: #{tpu_custom_call.1} parent=5 // pred_region
        %s149 = ssub.s32 %s15, 1
        %s150 = sand.u32 %s28, 1
        %s151 = scalar_lea.sflag [#allocation3], %s150
        %s152 = sand.u32 %s28, 1
        %s153 = smul.addr %s152, 72
        %s154 = scalar_lea.vmem [#allocation2], %s153
        // Predicated region
        $region29: #{tpu_custom_call.1} parent=27 // pred_check
          %p155 = pneg %p41
        $region30: #{tpu_custom_call.1} parent=27 // pred_check_branch
          %157 = sbr.rel (%p155) target = $region32
        $region31: #{tpu_custom_call.1} parent=27 // pred_region
          %159 = dma.done %s151, 1152
        $region32: #{tpu_custom_call.1} parent=27 // pred_fallthru
          _
        // Predicated region
        $region33: #{tpu_custom_call.1} parent=27 // pred_check
          %p160 = pneg %p62
        $region34: #{tpu_custom_call.1} parent=27 // pred_check_branch
          %162 = sbr.rel (%p160) target = $region36
        $region35: #{tpu_custom_call.1} parent=27 // pred_region
          %164 = dma.done [#allocation6], 2944
        $region36: #{tpu_custom_call.1} parent=27 // pred_fallthru
          _
        %s165 = sand.u32 %s28, 1
        %s166 = scalar_lea.sflag [#allocation3], %s165
        %s167 = sand.u32 %s28, 1
        %s168 = smul.addr %s167, 72
        %s169 = scalar_lea.vmem [#allocation2], %s168
        %p170 = pneg %p41
        %p171 = pneg %p38
        %p172 = pneg %p62
        %p173 = pneg %p59
        %p174 = pneg %p88
        %p175 = pneg %p85
        %s176 = sand.u32 %s75, 1
        %s177 = scalar_lea.sflag [#allocation4], %s176
        %s178 = sand.u32 %s75, 1
        %s179 = scalar_lea.vmem [#allocation7], %s178
        %v181 = vld [vmem:[%s154] sm:$0xff]
        %v182 = vld [vmem:[%s154 + $0x8] sm:$0xff]
        %v183 = vld [vmem:[%s154 + $0x10] sm:$0xff]
        %v184 = vld [vmem:[%s154 + $0x18] sm:$0xff]
        %v185 = vpack.c.bf16 %v182, %v181
        %v186 = vpack.c.bf16 %v184, %v183
        %v187 = vld [vmem:[%s154 + $0x28] sm:$0xff]
        %v188 = vld [vmem:[%s154 + $0x30] sm:$0xff]
        %v189 = vld [vmem:[%s154 + $0x38] sm:$0xff]
        %v190 = vld [vmem:[%s154 + $0x40] sm:$0xff]
        %v191 = vpack.c.bf16 %v188, %v187
        %v192 = vpack.c.bf16 %v190, %v189
        %vm193 = vcmask 261120
        %v195 = vsel %vm193, %v185, 0
        %v198 = vsel %vm193, %v186, 0
        %200 = vmatpush.bf16.msra.mxu0 0
        %201 = vmatpush.bf16.msra.mxu0 0
        %202 = vmatpush.bf16.msra.mxu0 0
        %203 = vmatpush.bf16.msra.mxu0 0
        %204 = vmatpush.bf16.msra.mxu0 0
        %205 = vmatpush.bf16.msra.mxu0 0
        %206 = vmatpush.bf16.msra.mxu0 %v192
        %207 = vmatpush.bf16.msra.mxu0 %v191
        %208 = vmatmul.bf16.gmra.mxu0 %v195
        %v209 = vpop.f32.mrf.mxu0
        %v210 = vadd.f32 0.0, %v209
        %v211 = vpop.f32.mrf.mxu0
        %v212 = vadd.f32 0.0, %v211
        %213 = vmatmul.bf16.gmra.mxu0 %v198
        %v214 = vpop.f32.mrf.mxu0
        %v215 = vadd.f32 0.0, %v214
        %v216 = vpop.f32.mrf.mxu0
        %v217 = vadd.f32 0.0, %v216
        %218 = vdwg.mxu0
        %v219 = vld [vmem:[#allocation5] sm:$0xff]
        %v220 = vpack.c.bf16 %v219, %v219
        %v221 = vpack.c.bf16 %v212, %v210
        %v222 = vpack.c.bf16 %v217, %v215
        %v223 = vld [vmem:[#allocation5 + $0xa8] sm:$0x1]
        %v224 = vperm.slane %v223, 0
        %vm225 = vcmask 64512
        %v227 = vsel %vm225, %v221, 0
        %v230 = vsel %vm225, %v222, 0
        %vm232 = vcmask 1043456
        %v234 = vsel %vm232, %v220, 0
        %236 = vmatpush.bf16.msra.mxu0 0
        %237 = vmatpush.bf16.msra.mxu0 0
        %238 = vmatpush.bf16.msra.mxu0 0
        %239 = vmatpush.bf16.msra.mxu0 0
        %240 = vmatpush.bf16.msra.mxu0 0
        %241 = vmatpush.bf16.msra.mxu0 0
        %242 = vmatpush.bf16.msra.mxu0 0
        %243 = vmatpush.bf16.msra.mxu0 %v234
        %244 = vmatmul.bf16.gmra.mxu0 %v227
        %v245 = vpop.f32.mrf.mxu0
        %v246 = vadd.f32 %v224, %v245
        %v247 = vpop.f32.mrf.mxu0
        %v248 = vadd.f32 %v224, %v247
        %249 = vmatmul.bf16.gmra.mxu0 %v230
        %v250 = vpop.f32.mrf.mxu0
        %v251 = vadd.f32 %v224, %v250
        %v252 = vpop.f32.mrf.mxu0
        %v253 = vadd.f32 %v224, %v252
        %254 = vdwg.mxu0
        %v255 = vmax.f32 %v246, 0.0
        %v256 = vmax.f32 %v248, 0.0
        %v257 = vmax.f32 %v251, 0.0
        %v258 = vmax.f32 %v253, 0.0
        %v259 = vld [vmem:[#allocation5 + $0xa9] sm:$0x1]
        %v260 = vld [vmem:[#allocation5 + $0xaa] sm:$0x1]
        %v261 = vsel %vm193, %v255, 0.0
        %262 = vadd.xlane.f32.xlu0 %v261
        %v263 = vpop.xlane.xlu0 %262
        %v264 = vsel %vm193, %v256, 0.0
        %265 = vadd.xlane.f32.xlu0 %v264
        %v266 = vpop.xlane.xlu0 %265
        %v267 = vsel %vm193, %v257, 0.0
        %268 = vadd.xlane.f32.xlu0 %v267
        %v269 = vpop.xlane.xlu0 %268
        %v270 = vsel %vm193, %v258, 0.0
        %271 = vadd.xlane.f32.xlu0 %v270
        %v272 = vpop.xlane.xlu0 %271
        %v273 = vmul.f32 %v263, 0.03125
        %v274 = vmul.f32 %v266, 0.03125
        %v275 = vmul.f32 %v269, 0.03125
        %v276 = vmul.f32 %v272, 0.03125
        %v277 = vmul.f32 %v255, %v255
        %v278 = vmul.f32 %v256, %v256
        %v279 = vmul.f32 %v257, %v257
        %v280 = vmul.f32 %v258, %v258
        %v281 = vsel %vm193, %v277, 0.0
        %282 = vadd.xlane.f32.xlu0 %v281
        %v283 = vpop.xlane.xlu0 %282
        %v284 = vsel %vm193, %v278, 0.0
        %285 = vadd.xlane.f32.xlu0 %v284
        %v286 = vpop.xlane.xlu0 %285
        %v287 = vsel %vm193, %v279, 0.0
        %288 = vadd.xlane.f32.xlu0 %v287
        %v289 = vpop.xlane.xlu0 %288
        %v290 = vsel %vm193, %v280, 0.0
        %291 = vadd.xlane.f32.xlu0 %v290
        %v292 = vpop.xlane.xlu0 %291
        %v293 = vmul.f32 %v283, 0.03125
        %v294 = vmul.f32 %v286, 0.03125
        %v295 = vmul.f32 %v289, 0.03125
        %v296 = vmul.f32 %v292, 0.03125
        %v297 = vmul.f32 %v273, %v273
        %v298 = vmul.f32 %v274, %v274
        %v299 = vmul.f32 %v275, %v275
        %v300 = vmul.f32 %v276, %v276
        %v301 = vsub.f32 %v293, %v297
        %v302 = vsub.f32 %v294, %v298
        %v303 = vsub.f32 %v295, %v299
        %v304 = vsub.f32 %v296, %v300
        %v305 = vsub.f32 %v255, %v273
        %v306 = vsub.f32 %v256, %v274
        %v307 = vsub.f32 %v257, %v275
        %v308 = vsub.f32 %v258, %v276
        %v309 = vadd.f32 %v301, 1e-05
        %v310 = vadd.f32 %v302, 1e-05
        %v311 = vadd.f32 %v303, 1e-05
        %v312 = vadd.f32 %v304, 1e-05
        %v313 = vrsqrt.pop %v309
        %v314 = vmul.f32 %v313, %v309
        %v315 = vmul.f32 %v314, %v313
        %v316 = vmul.f32 0.5, %v315
        %v317 = vsub.f32 1.5, %v316
        %v318 = vmul.f32 %v313, %v317
        %vm319 = vweird.f32 %v309
        %vm320 = vweird.f32 %v313
        %vm321 = vmor %vm319, %vm320
        %v322 = vsel %vm321, %v313, %v318
        %v323 = vrsqrt.pop %v310
        %v324 = vmul.f32 %v323, %v310
        %v325 = vmul.f32 %v324, %v323
        %v326 = vmul.f32 0.5, %v325
        %v327 = vsub.f32 1.5, %v326
        %v328 = vmul.f32 %v323, %v327
        %vm329 = vweird.f32 %v310
        %vm330 = vweird.f32 %v323
        %vm331 = vmor %vm329, %vm330
        %v332 = vsel %vm331, %v323, %v328
        %v333 = vrsqrt.pop %v311
        %v334 = vmul.f32 %v333, %v311
        %v335 = vmul.f32 %v334, %v333
        %v336 = vmul.f32 0.5, %v335
        %v337 = vsub.f32 1.5, %v336
        %v338 = vmul.f32 %v333, %v337
        %vm339 = vweird.f32 %v311
        %vm340 = vweird.f32 %v333
        %vm341 = vmor %vm339, %vm340
        %v342 = vsel %vm341, %v333, %v338
        %v343 = vrsqrt.pop %v312
        %v344 = vmul.f32 %v343, %v312
        %v345 = vmul.f32 %v344, %v343
        %v346 = vmul.f32 0.5, %v345
        %v347 = vsub.f32 1.5, %v346
        %v348 = vmul.f32 %v343, %v347
        %vm349 = vweird.f32 %v312
        %vm350 = vweird.f32 %v343
        %vm351 = vmor %vm349, %vm350
        %v352 = vsel %vm351, %v343, %v348
        %v353 = vmul.f32 %v305, %v322
        %v354 = vmul.f32 %v306, %v332
        %v355 = vmul.f32 %v307, %v342
        %v356 = vmul.f32 %v308, %v352
        %v357 = vperm.slane %v259, 0
        %v358 = vmul.f32 %v353, %v357
        %v359 = vmul.f32 %v354, %v357
        %v360 = vmul.f32 %v355, %v357
        %v361 = vmul.f32 %v356, %v357
        %v362 = vperm.slane %v260, 0
        %v363 = vadd.f32 %v358, %v362
        %v364 = vadd.f32 %v359, %v362
        %v365 = vadd.f32 %v360, %v362
        %v366 = vadd.f32 %v361, %v362
        %v367 = vld [vmem:[#allocation5 + $0x8] sm:$0xff]
        %v368 = vld [vmem:[#allocation5 + $0x10] sm:$0xff]
        %v369 = vld [vmem:[#allocation5 + $0x18] sm:$0xff]
        %v370 = vld [vmem:[#allocation5 + $0x20] sm:$0xff]
        %v371 = vpack.c.bf16 %v368, %v367
        %v372 = vpack.c.bf16 %v370, %v369
        %v373 = vpack.c.bf16 %v364, %v363
        %v374 = vpack.c.bf16 %v366, %v365
        %v376 = vsel %vm193, %v373, 0
        %v379 = vsel %vm193, %v374, 0
        %381 = vmatpush.bf16.msra.mxu0 0
        %382 = vmatpush.bf16.msra.mxu0 0
        %383 = vmatpush.bf16.msra.mxu0 0
        %384 = vmatpush.bf16.msra.mxu0 0
        %385 = vmatpush.bf16.msra.mxu0 0
        %386 = vmatpush.bf16.msra.mxu0 0
        %387 = vmatpush.bf16.msra.mxu0 %v372
        %388 = vmatpush.bf16.msra.mxu0 %v371
        %389 = vmatmul.bf16.gmra.mxu0 %v376
        %v390 = vpop.f32.mrf.mxu0
        %v391 = vadd.f32 0.0, %v390
        %v392 = vpop.f32.mrf.mxu0
        %v393 = vadd.f32 0.0, %v392
        %394 = vmatmul.bf16.gmra.mxu0 %v379
        %v395 = vpop.f32.mrf.mxu0
        %v396 = vadd.f32 0.0, %v395
        %v397 = vpop.f32.mrf.mxu0
        %v398 = vadd.f32 0.0, %v397
        %399 = vdwg.mxu0
        %v400 = vpack.c.bf16 %v393, %v391
        %v401 = vpack.c.bf16 %v398, %v396
        %v402 = vld [vmem:[#allocation5 + $0xab] sm:$0x1]
        %v403 = vperm.slane %v402, 0
        %404 = vmatpush.bf16.msra.mxu0 0
        %405 = vmatpush.bf16.msra.mxu0 0
        %406 = vmatpush.bf16.msra.mxu0 0
        %407 = vmatpush.bf16.msra.mxu0 0
        %408 = vmatpush.bf16.msra.mxu0 0
        %409 = vmatpush.bf16.msra.mxu0 0
        %410 = vmatpush.bf16.msra.mxu0 %v401
        %411 = vmatpush.bf16.msra.mxu0 %v400
        %412 = vmatmul.bf16.gmra.mxu0 %v195
        %v413 = vpop.f32.mrf.mxu0
        %v414 = vadd.f32 %v403, %v413
        %v415 = vpop.f32.mrf.mxu0
        %v416 = vadd.f32 %v403, %v415
        %417 = vmatmul.bf16.gmra.mxu0 %v198
        %v418 = vpop.f32.mrf.mxu0
        %v419 = vadd.f32 %v403, %v418
        %v420 = vpop.f32.mrf.mxu0
        %v421 = vadd.f32 %v403, %v420
        %422 = vdwg.mxu0
        %v423 = vmax.f32 %v414, 0.0
        %v424 = vmax.f32 %v416, 0.0
        %v425 = vmax.f32 %v419, 0.0
        %v426 = vmax.f32 %v421, 0.0
        %v427 = vld [vmem:[#allocation5 + $0xac] sm:$0x1]
        %v428 = vld [vmem:[#allocation5 + $0xad] sm:$0x1]
        %v429 = vsel %vm193, %v423, 0.0
        %430 = vadd.xlane.f32.xlu0 %v429
        %v431 = vpop.xlane.xlu0 %430
        %v432 = vsel %vm193, %v424, 0.0
        %433 = vadd.xlane.f32.xlu0 %v432
        %v434 = vpop.xlane.xlu0 %433
        %v435 = vsel %vm193, %v425, 0.0
        %436 = vadd.xlane.f32.xlu0 %v435
        %v437 = vpop.xlane.xlu0 %436
        %v438 = vsel %vm193, %v426, 0.0
        %439 = vadd.xlane.f32.xlu0 %v438
        %v440 = vpop.xlane.xlu0 %439
        %v441 = vmul.f32 %v431, 0.03125
        %v442 = vmul.f32 %v434, 0.03125
        %v443 = vmul.f32 %v437, 0.03125
        %v444 = vmul.f32 %v440, 0.03125
        %v445 = vmul.f32 %v423, %v423
        %v446 = vmul.f32 %v424, %v424
        %v447 = vmul.f32 %v425, %v425
        %v448 = vmul.f32 %v426, %v426
        %v449 = vsel %vm193, %v445, 0.0
        %450 = vadd.xlane.f32.xlu0 %v449
        %v451 = vpop.xlane.xlu0 %450
        %v452 = vsel %vm193, %v446, 0.0
        %453 = vadd.xlane.f32.xlu0 %v452
        %v454 = vpop.xlane.xlu0 %453
        %v455 = vsel %vm193, %v447, 0.0
        %456 = vadd.xlane.f32.xlu0 %v455
        %v457 = vpop.xlane.xlu0 %456
        %v458 = vsel %vm193, %v448, 0.0
        %459 = vadd.xlane.f32.xlu0 %v458
        %v460 = vpop.xlane.xlu0 %459
        %v461 = vmul.f32 %v451, 0.03125
        %v462 = vmul.f32 %v454, 0.03125
        %v463 = vmul.f32 %v457, 0.03125
        %v464 = vmul.f32 %v460, 0.03125
        %v465 = vmul.f32 %v441, %v441
        %v466 = vmul.f32 %v442, %v442
        %v467 = vmul.f32 %v443, %v443
        %v468 = vmul.f32 %v444, %v444
        %v469 = vsub.f32 %v461, %v465
        %v470 = vsub.f32 %v462, %v466
        %v471 = vsub.f32 %v463, %v467
        %v472 = vsub.f32 %v464, %v468
        %v473 = vsub.f32 %v423, %v441
        %v474 = vsub.f32 %v424, %v442
        %v475 = vsub.f32 %v425, %v443
        %v476 = vsub.f32 %v426, %v444
        %v477 = vadd.f32 %v469, 1e-05
        %v478 = vadd.f32 %v470, 1e-05
        %v479 = vadd.f32 %v471, 1e-05
        %v480 = vadd.f32 %v472, 1e-05
        %v481 = vrsqrt.pop %v477
        %v482 = vmul.f32 %v481, %v477
        %v483 = vmul.f32 %v482, %v481
        %v484 = vmul.f32 0.5, %v483
        %v485 = vsub.f32 1.5, %v484
        %v486 = vmul.f32 %v481, %v485
        %vm487 = vweird.f32 %v477
        %vm488 = vweird.f32 %v481
        %vm489 = vmor %vm487, %vm488
        %v490 = vsel %vm489, %v481, %v486
        %v491 = vrsqrt.pop %v478
        %v492 = vmul.f32 %v491, %v478
        %v493 = vmul.f32 %v492, %v491
        %v494 = vmul.f32 0.5, %v493
        %v495 = vsub.f32 1.5, %v494
        %v496 = vmul.f32 %v491, %v495
        %vm497 = vweird.f32 %v478
        %vm498 = vweird.f32 %v491
        %vm499 = vmor %vm497, %vm498
        %v500 = vsel %vm499, %v491, %v496
        %v501 = vrsqrt.pop %v479
        %v502 = vmul.f32 %v501, %v479
        %v503 = vmul.f32 %v502, %v501
        %v504 = vmul.f32 0.5, %v503
        %v505 = vsub.f32 1.5, %v504
        %v506 = vmul.f32 %v501, %v505
        %vm507 = vweird.f32 %v479
        %vm508 = vweird.f32 %v501
        %vm509 = vmor %vm507, %vm508
        %v510 = vsel %vm509, %v501, %v506
        %v511 = vrsqrt.pop %v480
        %v512 = vmul.f32 %v511, %v480
        %v513 = vmul.f32 %v512, %v511
        %v514 = vmul.f32 0.5, %v513
        %v515 = vsub.f32 1.5, %v514
        %v516 = vmul.f32 %v511, %v515
        %vm517 = vweird.f32 %v480
        %vm518 = vweird.f32 %v511
        %vm519 = vmor %vm517, %vm518
        %v520 = vsel %vm519, %v511, %v516
        %v521 = vmul.f32 %v473, %v490
        %v522 = vmul.f32 %v474, %v500
        %v523 = vmul.f32 %v475, %v510
        %v524 = vmul.f32 %v476, %v520
        %v525 = vperm.slane %v427, 0
        %v526 = vmul.f32 %v521, %v525
        %v527 = vmul.f32 %v522, %v525
        %v528 = vmul.f32 %v523, %v525
        %v529 = vmul.f32 %v524, %v525
        %v530 = vperm.slane %v428, 0
        %v531 = vadd.f32 %v526, %v530
        %v532 = vadd.f32 %v527, %v530
        %v533 = vadd.f32 %v528, %v530
        %v534 = vadd.f32 %v529, %v530
        %v535 = vld [vmem:[#allocation5 + $0x28] sm:$0xff]
        %v536 = vld [vmem:[#allocation5 + $0x30] sm:$0xff]
        %v537 = vld [vmem:[#allocation5 + $0x38] sm:$0xff]
        %v538 = vld [vmem:[#allocation5 + $0x40] sm:$0xff]
        %v539 = vpack.c.bf16 %v536, %v535
        %v540 = vpack.c.bf16 %v538, %v537
        %v541 = vpack.c.bf16 %v532, %v531
        %v542 = vpack.c.bf16 %v534, %v533
        %v544 = vsel %vm193, %v541, 0
        %v547 = vsel %vm193, %v542, 0
        %549 = vmatpush.bf16.msra.mxu0 0
        %550 = vmatpush.bf16.msra.mxu0 0
        %551 = vmatpush.bf16.msra.mxu0 0
        %552 = vmatpush.bf16.msra.mxu0 0
        %553 = vmatpush.bf16.msra.mxu0 0
        %554 = vmatpush.bf16.msra.mxu0 0
        %555 = vmatpush.bf16.msra.mxu0 %v540
        %556 = vmatpush.bf16.msra.mxu0 %v539
        %557 = vmatmul.bf16.gmra.mxu0 %v544
        %v558 = vpop.f32.mrf.mxu0
        %v559 = vadd.f32 0.0, %v558
        %v560 = vpop.f32.mrf.mxu0
        %v561 = vadd.f32 0.0, %v560
        %562 = vmatmul.bf16.gmra.mxu0 %v547
        %v563 = vpop.f32.mrf.mxu0
        %v564 = vadd.f32 0.0, %v563
        %v565 = vpop.f32.mrf.mxu0
        %v566 = vadd.f32 0.0, %v565
        %567 = vdwg.mxu0
        %v568 = vpack.c.bf16 %v561, %v559
        %v569 = vpack.c.bf16 %v566, %v564
        %v570 = vld [vmem:[#allocation5 + $0xae] sm:$0x1]
        %v571 = vperm.slane %v570, 0
        %572 = vmatpush.bf16.msra.mxu0 0
        %573 = vmatpush.bf16.msra.mxu0 0
        %574 = vmatpush.bf16.msra.mxu0 0
        %575 = vmatpush.bf16.msra.mxu0 0
        %576 = vmatpush.bf16.msra.mxu0 0
        %577 = vmatpush.bf16.msra.mxu0 0
        %578 = vmatpush.bf16.msra.mxu0 %v569
        %579 = vmatpush.bf16.msra.mxu0 %v568
        %580 = vmatmul.bf16.gmra.mxu0 %v195
        %v581 = vpop.f32.mrf.mxu0
        %v582 = vadd.f32 %v571, %v581
        %v583 = vpop.f32.mrf.mxu0
        %v584 = vadd.f32 %v571, %v583
        %585 = vmatmul.bf16.gmra.mxu0 %v198
        %v586 = vpop.f32.mrf.mxu0
        %v587 = vadd.f32 %v571, %v586
        %v588 = vpop.f32.mrf.mxu0
        %v589 = vadd.f32 %v571, %v588
        %590 = vdwg.mxu0
        %v591 = vmax.f32 %v582, 0.0
        %v592 = vmax.f32 %v584, 0.0
        %v593 = vmax.f32 %v587, 0.0
        %v594 = vmax.f32 %v589, 0.0
        %v595 = vld [vmem:[#allocation5 + $0xaf] sm:$0x1]
        %v596 = vld [vmem:[#allocation5 + $0xb0] sm:$0x1]
        %v597 = vsel %vm193, %v591, 0.0
        %598 = vadd.xlane.f32.xlu0 %v597
        %v599 = vpop.xlane.xlu0 %598
        %v600 = vsel %vm193, %v592, 0.0
        %601 = vadd.xlane.f32.xlu0 %v600
        %v602 = vpop.xlane.xlu0 %601
        %v603 = vsel %vm193, %v593, 0.0
        %604 = vadd.xlane.f32.xlu0 %v603
        %v605 = vpop.xlane.xlu0 %604
        %v606 = vsel %vm193, %v594, 0.0
        %607 = vadd.xlane.f32.xlu0 %v606
        %v608 = vpop.xlane.xlu0 %607
        %v609 = vmul.f32 %v599, 0.03125
        %v610 = vmul.f32 %v602, 0.03125
        %v611 = vmul.f32 %v605, 0.03125
        %v612 = vmul.f32 %v608, 0.03125
        %v613 = vmul.f32 %v591, %v591
        %v614 = vmul.f32 %v592, %v592
        %v615 = vmul.f32 %v593, %v593
        %v616 = vmul.f32 %v594, %v594
        %v617 = vsel %vm193, %v613, 0.0
        %618 = vadd.xlane.f32.xlu0 %v617
        %v619 = vpop.xlane.xlu0 %618
        %v620 = vsel %vm193, %v614, 0.0
        %621 = vadd.xlane.f32.xlu0 %v620
        %v622 = vpop.xlane.xlu0 %621
        %v623 = vsel %vm193, %v615, 0.0
        %624 = vadd.xlane.f32.xlu0 %v623
        %v625 = vpop.xlane.xlu0 %624
        %v626 = vsel %vm193, %v616, 0.0
        %627 = vadd.xlane.f32.xlu0 %v626
        %v628 = vpop.xlane.xlu0 %627
        %v629 = vmul.f32 %v619, 0.03125
        %v630 = vmul.f32 %v622, 0.03125
        %v631 = vmul.f32 %v625, 0.03125
        %v632 = vmul.f32 %v628, 0.03125
        %v633 = vmul.f32 %v609, %v609
        %v634 = vmul.f32 %v610, %v610
        %v635 = vmul.f32 %v611, %v611
        %v636 = vmul.f32 %v612, %v612
        %v637 = vsub.f32 %v629, %v633
        %v638 = vsub.f32 %v630, %v634
        %v639 = vsub.f32 %v631, %v635
        %v640 = vsub.f32 %v632, %v636
        %v641 = vsub.f32 %v591, %v609
        %v642 = vsub.f32 %v592, %v610
        %v643 = vsub.f32 %v593, %v611
        %v644 = vsub.f32 %v594, %v612
        %v645 = vadd.f32 %v637, 1e-05
        %v646 = vadd.f32 %v638, 1e-05
        %v647 = vadd.f32 %v639, 1e-05
        %v648 = vadd.f32 %v640, 1e-05
        %v649 = vrsqrt.pop %v645
        %v650 = vmul.f32 %v649, %v645
        %v651 = vmul.f32 %v650, %v649
        %v652 = vmul.f32 0.5, %v651
        %v653 = vsub.f32 1.5, %v652
        %v654 = vmul.f32 %v649, %v653
        %vm655 = vweird.f32 %v645
        %vm656 = vweird.f32 %v649
        %vm657 = vmor %vm655, %vm656
        %v658 = vsel %vm657, %v649, %v654
        %v659 = vrsqrt.pop %v646
        %v660 = vmul.f32 %v659, %v646
        %v661 = vmul.f32 %v660, %v659
        %v662 = vmul.f32 0.5, %v661
        %v663 = vsub.f32 1.5, %v662
        %v664 = vmul.f32 %v659, %v663
        %vm665 = vweird.f32 %v646
        %vm666 = vweird.f32 %v659
        %vm667 = vmor %vm665, %vm666
        %v668 = vsel %vm667, %v659, %v664
        %v669 = vrsqrt.pop %v647
        %v670 = vmul.f32 %v669, %v647
        %v671 = vmul.f32 %v670, %v669
        %v672 = vmul.f32 0.5, %v671
        %v673 = vsub.f32 1.5, %v672
        %v674 = vmul.f32 %v669, %v673
        %vm675 = vweird.f32 %v647
        %vm676 = vweird.f32 %v669
        %vm677 = vmor %vm675, %vm676
        %v678 = vsel %vm677, %v669, %v674
        %v679 = vrsqrt.pop %v648
        %v680 = vmul.f32 %v679, %v648
        %v681 = vmul.f32 %v680, %v679
        %v682 = vmul.f32 0.5, %v681
        %v683 = vsub.f32 1.5, %v682
        %v684 = vmul.f32 %v679, %v683
        %vm685 = vweird.f32 %v648
        %vm686 = vweird.f32 %v679
        %vm687 = vmor %vm685, %vm686
        %v688 = vsel %vm687, %v679, %v684
        %v689 = vmul.f32 %v641, %v658
        %v690 = vmul.f32 %v642, %v668
        %v691 = vmul.f32 %v643, %v678
        %v692 = vmul.f32 %v644, %v688
        %v693 = vperm.slane %v595, 0
        %v694 = vmul.f32 %v689, %v693
        %v695 = vmul.f32 %v690, %v693
        %v696 = vmul.f32 %v691, %v693
        %v697 = vmul.f32 %v692, %v693
        %v698 = vperm.slane %v596, 0
        %v699 = vadd.f32 %v694, %v698
        %v700 = vadd.f32 %v695, %v698
        %v701 = vadd.f32 %v696, %v698
        %v702 = vadd.f32 %v697, %v698
        %v703 = vld [vmem:[%s154 + $0x20] sm:$0x1]
        %v704 = vpack.c.bf16 %v703, %v703
        %v705 = vpack.c.bf16 %v700, %v699
        %v706 = vpack.c.bf16 %v702, %v701
        %v708 = vsel %vm193, %v704, 0
        %710 = vmatpush.bf16.msra.mxu0 0
        %711 = vmatpush.bf16.msra.mxu0 0
        %712 = vmatpush.bf16.msra.mxu0 0
        %713 = vmatpush.bf16.msra.mxu0 0
        %714 = vmatpush.bf16.msra.mxu0 0
        %715 = vmatpush.bf16.msra.mxu0 0
        %716 = vmatpush.bf16.msra.mxu0 %v706
        %717 = vmatpush.bf16.msra.mxu0 %v705
        %718 = vmatmul.bf16.gmra.mxu0 %v708
        %v719 = vpop.f32.mrf.mxu0
        %v720 = vadd.f32 0.0, %v719
        %v721 = vpop.f32.mrf.mxu0
        %722 = vdwg.mxu0
        %v723 = vld [vmem:[#allocation5 + $0x48] sm:$0xff]
        %v724 = vld [vmem:[#allocation5 + $0x50] sm:$0xff]
        %v725 = vld [vmem:[#allocation5 + $0x58] sm:$0xff]
        %v726 = vld [vmem:[#allocation5 + $0x60] sm:$0xff]
        %v727 = vpack.c.bf16 %v724, %v723
        %v728 = vpack.c.bf16 %v726, %v725
        %v729 = vpack.c.bf16 %v720, %v720
        %v730 = vld [vmem:[#allocation5 + $0xb1] sm:$0x1]
        %v732 = vsel %vm193, %v729, 0
        %734 = vmatpush.bf16.msra.mxu0 0
        %735 = vmatpush.bf16.msra.mxu0 0
        %736 = vmatpush.bf16.msra.mxu0 0
        %737 = vmatpush.bf16.msra.mxu0 0
        %738 = vmatpush.bf16.msra.mxu0 0
        %739 = vmatpush.bf16.msra.mxu0 0
        %740 = vmatpush.bf16.msra.mxu0 %v728
        %741 = vmatpush.bf16.msra.mxu0 %v727
        %742 = vmatmul.bf16.gmra.mxu0 %v732
        %v743 = vpop.f32.mrf.mxu0
        %v744 = vadd.f32 %v730, %v743
        %v745 = vpop.f32.mrf.mxu0
        %746 = vdwg.mxu0
        %v747 = vmax.f32 %v744, 0.0
        %v748 = vld [vmem:[#allocation5 + $0x68] sm:$0xff]
        %v749 = vld [vmem:[#allocation5 + $0x70] sm:$0xff]
        %v750 = vld [vmem:[#allocation5 + $0x78] sm:$0xff]
        %v751 = vld [vmem:[#allocation5 + $0x80] sm:$0xff]
        %v752 = vld [vmem:[#allocation5 + $0x88] sm:$0xff]
        %v753 = vld [vmem:[#allocation5 + $0x90] sm:$0xff]
        %v754 = vld [vmem:[#allocation5 + $0x98] sm:$0xff]
        %v755 = vld [vmem:[#allocation5 + $0xa0] sm:$0xff]
        %v756 = vpack.c.bf16 %v749, %v748
        %v757 = vpack.c.bf16 %v751, %v750
        %v758 = vpack.c.bf16 %v753, %v752
        %v759 = vpack.c.bf16 %v755, %v754
        %v760 = vpack.c.bf16 %v747, %v747
        %v761 = vld [vmem:[#allocation5 + $0xb2] sm:$0x1]
        %vm762 = vcmask 523264
        %v764 = vsel %vm762, %v760, 0
        %766 = vmatpush.bf16.msra.mxu0 0
        %767 = vmatpush.bf16.msra.mxu0 0
        %768 = vmatpush.bf16.msra.mxu0 0
        %769 = vmatpush.bf16.msra.mxu0 0
        %770 = vmatpush.bf16.msra.mxu0 %v759
        %771 = vmatpush.bf16.msra.mxu0 %v758
        %772 = vmatpush.bf16.msra.mxu0 %v757
        %773 = vmatpush.bf16.msra.mxu0 %v756
        %774 = vmatmul.bf16.gmra.mxu0 %v764
        %v775 = vpop.f32.mrf.mxu0
        %v776 = vadd.f32 %v761, %v775
        %v777 = vpop.f32.mrf.mxu0
        %778 = vdwg.mxu0
        %vm779 = vcmask 57344
        %v780 = vsel %vm779, %v776, 0.0
        %781 = vadd.xlane.f32.xlu0 %v780
        %v782 = vpop.xlane.xlu0 %781
        %v783 = vmul.f32 %v782, 0.125
        %v784 = vsub.f32 %v776, %v783
        %786 = vset.pattern.permute.xlu0 8
        %787 = vperm.xlu0 %786, %v784
        %v788 = vpop.permute.xlu0 %787
        %v790 = vadd.f32 %v776, %v788
        %791 = vst [vmem:[%s179] sm:$0x1] %v790
        %s792 = sand.u32 %s75, 1
        %s793 = scalar_lea.sflag [#allocation4], %s792
        %s794 = sand.u32 %s75, 1
        %s795 = scalar_lea.vmem [#allocation7], %s794
        // Predicated region
        $region37: #{tpu_custom_call.1} parent=27 // pred_check
          %p796 = pneg %p85
        $region38: #{tpu_custom_call.1} parent=27 // pred_check_branch
          %798 = sbr.rel (%p796) target = $region40
        $region39: #{tpu_custom_call.1} parent=27 // pred_region
          %800 = vsyncadd %s793, 0
          %s801 = scalar_lea.hbm %s2, %s20
          %s803 = sshll.u32 %s795, 4
          %s804 = int_to_ptr.vmem [resolvable:$true] %s803
          %s805 = sshll.u32 %s801, 4
          %s806 = int_to_ptr.hbm [resolvable:$true] %s805
          %808 = dma.vmem_to_hbm [thread:$0]  %s804, 16, %s806, %s793
        $region40: #{tpu_custom_call.1} parent=27 // pred_fallthru
          _
      $region28: #{tpu_custom_call.1} parent=5 // pred_fallthru
        _
      %p809 = scmp.le.s32.totalorder 2, %s15
      // Predicated region
      $region41: #{tpu_custom_call.1} parent=5 // pred_check
        %p810 = pneg %p809
      $region42: #{tpu_custom_call.1} parent=5 // pred_check_branch
        %812 = sbr.rel (%p810) target = $region44
      $region43: #{tpu_custom_call.1} parent=5 // pred_region
        %s813 = ssub.s32 %s15, 2
        // Predicated region
        $region45: #{tpu_custom_call.1} parent=43 // pred_check
          %p814 = pneg %p91
        $region46: #{tpu_custom_call.1} parent=43 // pred_check_branch
          %816 = sbr.rel (%p814) target = $region48
        $region47: #{tpu_custom_call.1} parent=43 // pred_region
          %s817 = sand.u32 %s76, 1
          %s818 = scalar_lea.sflag [#allocation4], %s817
          %s819 = sand.u32 %s76, 1
          %s820 = scalar_lea.vmem [#allocation7], %s819
          %822 = dma.done %s818, 16
        $region48: #{tpu_custom_call.1} parent=43 // pred_fallthru
          _
      $region44: #{tpu_custom_call.1} parent=5 // pred_fallthru
        _
    $region6: #{tpu_custom_call.1} parent=1 // loop_footer
      %s19 = sadd.s32 1, %s15
    $region7: #{tpu_custom_call.1} parent=1 // loop_footer_branch
      %14 = sbr.rel target = $region3
    $region8: #{tpu_custom_call.1} parent=1 // loop_exit
      _
    %823 = vsyncpa [#allocation3], 1
    %s824 = scalar_lea.sflag [#allocation3], 1
    %825 = vsyncpa %s824, 1
    %826 = vsyncpa [#allocation6], 1
    %827 = vsyncpa [#allocation4], 1
    %s828 = scalar_lea.sflag [#allocation4], 1
    %829 = vsyncpa %s828, 1

</llo_original>
